<compile_context>
chip_gen: v5e
topology: v5e:2x2
jax: 0.10.0
libtpu: 0.0.40
codegen_flags: <defaults>
</compile_context>

<pallas_src>
import math

import jax
import jax.numpy as jnp
from jax.experimental import pallas as pl
from jax.experimental.pallas import tpu as pltpu


# ----------------------------------------------------------------------------
# helpers
# ----------------------------------------------------------------------------
def _round_up(x, m):
    return ((x + m - 1) // m) * m


def _choose_th(h_pad):
    """Largest lane-aligned hidden tile (capped at 256 for v7x VMEM) dividing h_pad."""
    for th in (256, 128):
        if h_pad % th == 0:
            return th
    return h_pad


def _regroup_gates(a, h_pad, th):
    """Reorder the 4*h_pad gate axis from [i|f|o|g] (each h_pad wide) into
    per-H-tile groups [tile0: i f o g | tile1: i f o g | ...] (each gate th
    wide) so a (..., 4*th) block along the last axis holds all four gates for
    one lane-aligned H tile."""
    lead = a.shape[:-1]
    nt = h_pad // th
    a = a.reshape(*lead, 4, nt, th)
    a = jnp.swapaxes(a, -3, -2)
    return a.reshape(*lead, 4 * h_pad)


def init_params(key, input_size, hidden_size, dtype=jnp.float32):
    """Matches reset_parameters(): every param ~ U(-std, std), std = 1/sqrt(H).
    Weights are stored pre-transposed: wi = i2h.weight.T (I,4H), wh = h2h.weight.T."""
    std = 1.0 / math.sqrt(hidden_size)
    k1, k2, k3, k4 = jax.random.split(key, 4)
    wi = jax.random.uniform(k1, (input_size, 4 * hidden_size), dtype, -std, std)
    wh = jax.random.uniform(k2, (hidden_size, 4 * hidden_size), dtype, -std, std)
    bi = jax.random.uniform(k3, (1, 4 * hidden_size), dtype, -std, std)
    bh = jax.random.uniform(k4, (1, 4 * hidden_size), dtype, -std, std)
    return {"wi": wi, "wh": wh, "bi": bi, "bh": bh}


def pack_params(params, *, compute_dtype=jnp.bfloat16):
    """Unified packing for BOTH kernel paths:
      * single-step cell:  "w" (K_pad, 4*H_pad) fused [x|h] weight with per-H-tile
                           regrouped gate columns (compute_dtype), "b" fused bias (f32).
      * fused sequence:    "wx" (I, 4*H_pad) input weight (gate-column padded),
                           "wh" (H_pad, 4*H_pad) recurrent weight, "b_seq" fused bias.
    Gate order is [i | f | o | g] everywhere."""
    wi, wh = params["wi"], params["wh"]          # (I, 4H), (H, 4H)
    I, H = wi.shape[0], wh.shape[0]
    k = I + H
    h_pad = _round_up(H, 128)
    k_pad = _round_up(k, 128)
    th = _choose_th(h_pad)

    # fused bias (f32), gate-column padded
    b4 = (params["bi"] + params["bh"]).reshape(4, H)
    b4 = jnp.pad(b4, ((0, 0), (0, h_pad - H)))                      # (4, h_pad)

    # ---- single-step cell operands: fused [x|h] weight, per-tile gate regroup
    w = jnp.concatenate([wi, wh], axis=0).reshape(k, 4, H)
    w = jnp.pad(w, ((0, k_pad - k), (0, 0), (0, h_pad - H)))
    w = w.reshape(k_pad, 4 * h_pad)
    w_cell = _regroup_gates(w, h_pad, th).astype(compute_dtype)
    b_cell = _regroup_gates(b4.reshape(1, 4 * h_pad), h_pad, th).astype(jnp.float32)

    # ---- sequence operands: Wx used by the hoisted XLA GEMM (no K padding
    #      needed), Wh padded/resident for the in-kernel recurrent matmul.
    wx = wi.reshape(I, 4, H)
    wx = jnp.pad(wx, ((0, 0), (0, 0), (0, h_pad - H)))
    wx = wx.reshape(I, 4 * h_pad).astype(compute_dtype)
    whp = wh.reshape(H, 4, H)
    whp = jnp.pad(whp, ((0, h_pad - H), (0, 0), (0, h_pad - H)))
    whp = whp.reshape(h_pad, 4 * h_pad).astype(compute_dtype)
    b_seq = b4.reshape(1, 4 * h_pad).astype(jnp.float32)

    return {"w": w_cell, "b": b_cell, "wx": wx, "wh": whp, "b_seq": b_seq}


# ----------------------------------------------------------------------------
# single-step cell kernel (the module's forward)
# ----------------------------------------------------------------------------
def _lstm_cell_kernel(xh_ref, c_ref, w_ref, b_ref, h_out_ref, c_out_ref):
    # One fused MXU GEMM: [x | h] @ [Wi ; Wh], f32 accumulation; gate math f32.
    preact = jnp.dot(xh_ref[...], w_ref[...],
                     preferred_element_type=jnp.float32) + b_ref[...]
    th = c_ref.shape[-1]
    gates = jax.nn.sigmoid(preact[:, :3 * th])        # fused i|f|o EUP stream
    i_t = gates[:, :th]
    f_t = gates[:, th:2 * th]
    o_t = gates[:, 2 * th:]
    g_t = jnp.tanh(preact[:, 3 * th:])
    c_t = c_ref[...] * f_t + i_t * g_t
    h_t = o_t * jnp.tanh(c_t)
    h_out_ref[...] = h_t.astype(h_out_ref.dtype)
    c_out_ref[...] = c_t.astype(c_out_ref.dtype)


def lstm_cell_pallas(x2d, h2d, c2d, packed):
    """One LSTM cell step. x2d: (B, I), h2d/c2d: (B, H). Returns (h_t, c_t).
    NOTE: do NOT drive multi-step workloads through this in a Python/scan loop;
    use lstm_sequence_pallas (per-call pad/concat + launch overhead dominate)."""
    B, I = x2d.shape
    H = h2d.shape[-1]
    w, b = packed["w"], packed["b"]
    k_pad = w.shape[0]
    h_pad = b.shape[-1] // 4
    th = _choose_th(h_pad)
    cd = w.dtype
    tm = min(_round_up(B, 16), 256)              # sublane/MXU aligned M tile
    b_pad = _round_up(B, tm)
    k = I + H

    xh = jnp.concatenate([x2d, h2d], axis=1).astype(cd)
    xh = jnp.pad(xh, ((0, b_pad - B), (0, k_pad - k)))
    c_in = jnp.pad(c2d.astype(jnp.float32), ((0, b_pad - B), (0, h_pad - H)))

    n_bm = b_pad // tm
    n_h = h_pad // th
    w_bytes = w.size * w.dtype.itemsize
    xh_bytes = xh.size * xh.dtype.itemsize
    if n_bm > 1 and w_bytes > xh_bytes:
        # W (the larger operand) is revisited across the inner batch axis ->
        # each weight column block is fetched from HBM exactly once.
        grid = (n_h, n_bm)
        xh_spec  = pl.BlockSpec((tm, k_pad),     lambda j, i: (i, 0))
        c_spec   = pl.BlockSpec((tm, th),        lambda j, i: (i, j))
        w_spec   = pl.BlockSpec((k_pad, 4 * th), lambda j, i: (0, j))
        b_spec   = pl.BlockSpec((1, 4 * th),     lambda j, i: (0, j))
        out_spec = pl.BlockSpec((tm, th),        lambda j, i: (i, j))
    else:
        grid = (n_bm, n_h)
        xh_spec  = pl.BlockSpec((tm, k_pad),     lambda i, j: (i, 0))
        c_spec   = pl.BlockSpec((tm, th),        lambda i, j: (i, j))
        w_spec   = pl.BlockSpec((k_pad, 4 * th), lambda i, j: (0, j))
        b_spec   = pl.BlockSpec((1, 4 * th),     lambda i, j: (0, j))
        out_spec = pl.BlockSpec((tm, th),        lambda i, j: (i, j))

    out_itemsize = jnp.dtype(x2d.dtype).itemsize
    # Explicit scoped-VMEM budget (double-buffered blocks) + headroom.
    need = (2 * tm * k_pad * w.dtype.itemsize            # [x|h] block
            + 2 * tm * th * 4                            # c block (f32)
            + 2 * k_pad * 4 * th * w.dtype.itemsize      # W block
            + 2 * 4 * th * 4                             # bias block
            + 2 * 2 * tm * th * out_itemsize)            # h/c out blocks
    vmem_limit = max(32 << 20, min(int(need * 1.25) + (2 << 20), 128 << 20))

    cost = pl.CostEstimate(
        flops=2 * b_pad * k_pad * 4 * h_pad,
        transcendentals=5 * b_pad * h_pad,
        bytes_accessed=int(xh.size * xh.dtype.itemsize + w.size * w.dtype.itemsize
                           + (c_in.size + b.size) * 4
                           + 2 * b_pad * h_pad * out_itemsize),
    )

    h_t, c_t = pl.pallas_call(
        _lstm_cell_kernel,
        grid=grid,
        in_specs=[xh_spec, c_spec, w_spec, b_spec],
        out_specs=(out_spec, out_spec),
        out_shape=(
            jax.ShapeDtypeStruct((b_pad, h_pad), x2d.dtype),
            jax.ShapeDtypeStruct((b_pad, h_pad), x2d.dtype),
        ),
        compiler_params=pltpu.CompilerParams(
            dimension_semantics=("parallel", "parallel"),
            vmem_limit_bytes=vmem_limit),
        cost_estimate=cost,
    )(xh, c_in, w, b)
    return h_t[:B, :H], c_t[:B, :H]


def lstm_forward(x, hidden, packed):
    """Mirrors LSTM.forward (eval mode): x (1,B,I), hidden=(h,c) each (1,B,H).
    Returns (h_t, (h_t, c_t)) with h_t/c_t of shape (1,B,H)."""
    h, c = hidden
    x2d = x.reshape(x.shape[1], -1)
    h2d = h.reshape(h.shape[1], -1)
    c2d = c.reshape(c.shape[1], -1)
    h_t, c_t = lstm_cell_pallas(x2d, h2d, c2d, packed)
    h_t = h_t.reshape(1, h_t.shape[0], -1)
    c_t = c_t.reshape(1, c_t.shape[0], -1)
    return h_t, (h_t, c_t)


# ----------------------------------------------------------------------------
# fused multi-step kernel: grid = (batch tiles, T), only h @ Wh on serial path
# ----------------------------------------------------------------------------
def _lstm_seq_kernel(px_ref, wh_hbm, h0_ref, c0_ref, h_seq_ref, c_last_ref,
                     wh_vmem, h_c, c_c, wh_sem):
    t = pl.program_id(1)

    @pl.when(t == 0)
    def _():
        # Load Wh into single-buffered VMEM scratch once per batch tile
        # (megacore-safe: each core that owns a batch tile loads its own copy;
        # no 2x double-buffer footprint for the resident recurrent weight).
        cp = pltpu.make_async_copy(wh_hbm, wh_vmem, wh_sem)
        cp.start()
        h_c[...] = h0_ref[...]        # bf16 shadow carry
        c_c[...] = c0_ref[...]        # f32 carry
        cp.wait()

    hp = h_c.shape[-1]
    # Only the recurrent GEMM sits on the serial path; x @ Wx (+ bias) was
    # hoisted into one large parallel GEMM and is streamed in as px_ref.
    preact = px_ref[0] + jnp.dot(h_c[...], wh_vmem[...],
                                 preferred_element_type=jnp.float32)
    gates = jax.nn.sigmoid(preact[:, :3 * hp])        # fused i|f|o EUP stream
    i_t = gates[:, :hp]
    f_t = gates[:, hp:2 * hp]
    o_t = gates[:, 2 * hp:]
    g_t = jnp.tanh(preact[:, 3 * hp:])
    c_t = c_c[...] * f_t + i_t * g_t
    h_t = o_t * jnp.tanh(c_t)

    h_bf = h_t.astype(h_c.dtype)                      # cast once at the source
    h_c[...] = h_bf
    c_c[...] = c_t
    if jnp.dtype(h_seq_ref.dtype) == jnp.dtype(h_c.dtype):
        h_seq_ref[0] = h_bf
    else:
        h_seq_ref[0] = h_t.astype(h_seq_ref.dtype)

    @pl.when(t == pl.num_programs(1) - 1)
    def _():
        c_last_ref[...] = c_t.astype(c_last_ref.dtype)


def lstm_sequence_pallas(x_seq, h0, c0, packed, out_dtype=jnp.bfloat16):
    """Runs T cell steps inside ONE pallas_call.  The input projection
    preact_x = x @ Wx + b is computed as a single large parallel GEMM outside
    the recurrence; the kernel streams (1, tb, 4*H_pad) preact blocks and only
    performs the recurrent h @ Wh matmul + gate math per step.  Wh stays
    resident (single-buffered) in VMEM scratch; (h, c) carries live in scratch.
    x_seq: (T,B,I); h0/c0: (B,H).  Returns (h_seq, h_T, c_T)."""
    T, B, I = x_seq.shape
    H = h0.shape[-1]
    wx, wh, b = packed["wx"], packed["wh"], packed["b_seq"]
    h_pad = wh.shape[0]
    G = 4 * h_pad
    cd = wh.dtype

    b_pad = _round_up(B, 16)                 # bf16 packs 16 rows per vreg group
    if b_pad > 128:
        b_pad = _round_up(b_pad, 128)
        tb = 128                             # >=2 batch tiles -> both v7x TCs
    else:
        tb = b_pad
    nb = b_pad // tb

    # ---- hoisted input projection: ONE well-shaped parallel GEMM (plain XLA).
    px = jnp.dot(x_seq.reshape(T * B, I).astype(cd), wx,
                 preferred_element_type=jnp.float32) + b        # (T*B, 4*h_pad)
    px = px.reshape(T, B, G)
    px = jnp.pad(px, ((0, 0), (0, b_pad - B), (0, 0)))

    h0p = jnp.pad(h0, ((0, b_pad - B), (0, h_pad - H))).astype(cd)
    c0p = jnp.pad(c0.astype(jnp.float32), ((0, b_pad - B), (0, h_pad - H)))

    out_itemsize = jnp.dtype(out_dtype).itemsize
    # Explicit scoped-VMEM budget: streamed blocks double-buffered, Wh single.
    need = (2 * tb * G * 4                           # preact_x blocks (f32)
            + h_pad * G * wh.dtype.itemsize          # Wh resident (1 buffer)
            + 2 * tb * h_pad * wh.dtype.itemsize     # h0 blocks (bf16)
            + 2 * tb * h_pad * 4                     # c0 blocks (f32)
            + 2 * 2 * tb * h_pad * out_itemsize      # h_seq + c_last out blocks
            + tb * h_pad * (wh.dtype.itemsize + 4))  # h/c carry scratch
    vmem_limit = max(32 << 20, min(int(need * 1.25) + (2 << 20), 128 << 20))

    cost = pl.CostEstimate(
        flops=2 * T * b_pad * h_pad * G,
        transcendentals=5 * T * b_pad * h_pad,
        bytes_accessed=int(px.size * 4 + wh.size * wh.dtype.itemsize
                           + h0p.size * h0p.dtype.itemsize + c0p.size * 4
                           + (T + 1) * b_pad * h_pad * out_itemsize),
    )

    h_seq, c_last = pl.pallas_call(
        _lstm_seq_kernel,
        grid=(nb, T),                                    # batch tiles x time
        in_specs=[
            pl.BlockSpec((1, tb, G), lambda bi, t: (t, bi, 0)),    # preact_x
            pl.BlockSpec(memory_space=pl.ANY),                     # Wh in HBM
            pl.BlockSpec((tb, h_pad), lambda bi, t: (bi, 0)),      # h0
            pl.BlockSpec((tb, h_pad), lambda bi, t: (bi, 0)),      # c0
        ],
        out_specs=(
            pl.BlockSpec((1, tb, h_pad), lambda bi, t: (t, bi, 0)),  # h per step
            pl.BlockSpec((tb, h_pad), lambda bi, t: (bi, 0)),        # c_T
        ),
        out_shape=(
            jax.ShapeDtypeStruct((T, b_pad, h_pad), out_dtype),
            jax.ShapeDtypeStruct((b_pad, h_pad), out_dtype),
        ),
        scratch_shapes=[
            pltpu.VMEM((h_pad, G), cd),            # Wh resident, single-buffer
            pltpu.VMEM((tb, h_pad), cd),           # h carry (bf16 shadow)
            pltpu.VMEM((tb, h_pad), jnp.float32),  # c carry (f32)
            pltpu.SemaphoreType.DMA,               # Wh load semaphore
        ],
        compiler_params=pltpu.CompilerParams(
            dimension_semantics=("parallel", "arbitrary"),  # recurrence over T
            vmem_limit_bytes=vmem_limit),
        cost_estimate=cost,
    )(px, wh, h0p, c0p)
    return h_seq[:, :B, :H], h_seq[-1, :B, :H], c_last[:B, :H]


# ----------------------------------------------------------------------------
# pure-JAX reference (eval-mode forward of the PyTorch module)
# ----------------------------------------------------------------------------
def _reference_cell(x2d, h2d, c2d, params, compute_dtype=jnp.bfloat16):
    cd = compute_dtype
    xh = jnp.concatenate([x2d, h2d], axis=1).astype(cd)
    w = jnp.concatenate([params["wi"], params["wh"]], axis=0).astype(cd)
    preact = (jnp.dot(xh, w, preferred_element_type=jnp.float32)
              + params["bi"] + params["bh"])
    H = c2d.shape[-1]
    i_t = jax.nn.sigmoid(preact[:, :H])
    f_t = jax.nn.sigmoid(preact[:, H:2 * H])
    o_t = jax.nn.sigmoid(preact[:, 2 * H:3 * H])
    g_t = jnp.tanh(preact[:, 3 * H:])
    c_t = c2d * f_t + i_t * g_t
    h_t = o_t * jnp.tanh(c_t)
    return h_t, c_t


if __name__ == "__main__":
    input_size, hidden_size, batch, seq_len = 16, 32, 4, 6
    key = jax.random.PRNGKey(0)
    kp, kx, kh, kc, ks = jax.random.split(key, 5)

    params = init_params(kp, input_size, hidden_size)
    packed = pack_params(params)                     # fused/padded operands

    x = jax.random.normal(kx, (1, batch, input_size), jnp.float32)
    h0 = jax.random.normal(kh, (1, batch, hidden_size), jnp.float32)
    c0 = jax.random.normal(kc, (1, batch, hidden_size), jnp.float32)

    # --- single cell step (the module's forward) ---
    h_t, (_, c_t) = jax.jit(lstm_forward)(x, (h0, c0), packed)
    jax.block_until_ready((h_t, c_t))

    h_ref, c_ref = _reference_cell(x.reshape(batch, -1), h0.reshape(batch, -1),
                                   c0.reshape(batch, -1), params)
    assert h_t.shape == (1, batch, hidden_size)
    assert c_t.shape == (1, batch, hidden_size)
    assert jnp.allclose(h_t[0], h_ref, atol=2e-2, rtol=2e-2)
    assert jnp.allclose(c_t[0], c_ref, atol=2e-2, rtol=2e-2)

    # --- fused multi-step kernel: hoisted x-projection, Wh resident in VMEM ---
    x_seq = jax.random.normal(ks, (seq_len, batch, input_size), jnp.float32)
    h_seq, h_last, c_last = jax.jit(lstm_sequence_pallas)(
        x_seq, h0.reshape(batch, -1), c0.reshape(batch, -1), packed)
    jax.block_until_ready((h_seq, h_last, c_last))

    hr, cr = h0.reshape(batch, -1), c0.reshape(batch, -1)
    for t in range(seq_len):
        hr, cr = _reference_cell(x_seq[t], hr, cr, params)
    assert h_seq.shape == (seq_len, batch, hidden_size)
    assert jnp.allclose(h_last.astype(jnp.float32), hr, atol=5e-2, rtol=5e-2)
    assert jnp.allclose(c_last.astype(jnp.float32), cr, atol=5e-2, rtol=5e-2)

    print("KERNEL_OK")
</pallas_src>

<mosaic_0001>
module attributes {stable_mosaic.version = 11 : i64} {
  func.func @_lstm_cell_kernel(%arg0: i32, %arg1: i32, %arg2: memref<16x128xbf16, #tpu.memory_space<vmem>>, %arg3: memref<16x128xf32, #tpu.memory_space<vmem>>, %arg4: memref<128x512xbf16, #tpu.memory_space<vmem>>, %arg5: memref<1x512xf32, #tpu.memory_space<vmem>>, %arg6: memref<16x128xf32, #tpu.memory_space<vmem>>, %arg7: memref<16x128xf32, #tpu.memory_space<vmem>>) attributes {dimension_semantics = [#tpu.dimension_semantics<parallel>, #tpu.dimension_semantics<parallel>], iteration_bounds = array<i64: 1, 1>, scalar_prefetch = 0 : i64, scratch_operands = 0 : i64, tpu.core_type = #tpu.core_type<tc>, window_params = [{transform_indices = @transform_0, window_bounds = array<i64: 16, 128>}, {transform_indices = @transform_1, window_bounds = array<i64: 16, 128>}, {transform_indices = @transform_2, window_bounds = array<i64: 128, 512>}, {transform_indices = @transform_3, window_bounds = array<i64: 1, 512>}, {transform_indices = @transform_4, window_bounds = array<i64: 16, 128>}, {transform_indices = @transform_5, window_bounds = array<i64: 16, 128>}]} {
    %c0 = arith.constant 0 : index
    %c0_0 = arith.constant 0 : index
    %0 = vector.load %arg2[%c0, %c0_0] : memref<16x128xbf16, #tpu.memory_space<vmem>>, vector<16x128xbf16>
    %c0_1 = arith.constant 0 : index
    %c0_2 = arith.constant 0 : index
    %1 = vector.load %arg4[%c0_1, %c0_2] : memref<128x512xbf16, #tpu.memory_space<vmem>>, vector<128x512xbf16>
    %cst = arith.constant dense<0.000000e+00> : vector<16x512xf32>
    %2 = tpu.matmul %0, %1, %cst {dimension_numbers = #tpu.dot_dimension_numbers<[1], [0], [0], [1], [0, 0, 1, 1], [], []>} : vector<16x128xbf16>, vector<128x512xbf16>, vector<16x512xf32> -> vector<16x512xf32>
    %c0_3 = arith.constant 0 : index
    %c0_4 = arith.constant 0 : index
    %3 = vector.load %arg5[%c0_3, %c0_4] : memref<1x512xf32, #tpu.memory_space<vmem>>, vector<1x512xf32>
    %4 = vector.broadcast %3 : vector<1x512xf32> to vector<16x512xf32>
    %5 = arith.addf %2, %4 : vector<16x512xf32>
    %6 = vector.extract_strided_slice %5 {offsets = [0, 0], sizes = [16, 384], strides = [1, 1]} : vector<16x512xf32> to vector<16x384xf32>
    %7 = arith.negf %6 : vector<16x384xf32>
    %8 = math.exp %7 : vector<16x384xf32>
    %cst_5 = arith.constant 1.000000e+00 : f32
    %9 = vector.broadcast %cst_5 : f32 to vector<16x384xf32>
    %10 = arith.addf %9, %8 : vector<16x384xf32>
    %11 = arith.divf %9, %10 : vector<16x384xf32>
    %12 = vector.extract_strided_slice %11 {offsets = [0, 0], sizes = [16, 128], strides = [1, 1]} : vector<16x384xf32> to vector<16x128xf32>
    %13 = vector.extract_strided_slice %11 {offsets = [0, 128], sizes = [16, 128], strides = [1, 1]} : vector<16x384xf32> to vector<16x128xf32>
    %14 = vector.extract_strided_slice %11 {offsets = [0, 256], sizes = [16, 128], strides = [1, 1]} : vector<16x384xf32> to vector<16x128xf32>
    %15 = vector.extract_strided_slice %5 {offsets = [0, 384], sizes = [16, 128], strides = [1, 1]} : vector<16x512xf32> to vector<16x128xf32>
    %16 = math.tanh %15 : vector<16x128xf32>
    %c0_6 = arith.constant 0 : index
    %c0_7 = arith.constant 0 : index
    %17 = vector.load %arg3[%c0_6, %c0_7] : memref<16x128xf32, #tpu.memory_space<vmem>>, vector<16x128xf32>
    %18 = arith.mulf %17, %13 : vector<16x128xf32>
    %19 = arith.mulf %12, %16 : vector<16x128xf32>
    %20 = arith.addf %18, %19 : vector<16x128xf32>
    %21 = math.tanh %20 : vector<16x128xf32>
    %22 = arith.mulf %14, %21 : vector<16x128xf32>
    %c0_8 = arith.constant 0 : index
    %c0_9 = arith.constant 0 : index
    %23 = vector.load %arg6[%c0_8, %c0_9] : memref<16x128xf32, #tpu.memory_space<vmem>>, vector<16x128xf32>
    tpu.vector_store %arg6[%c0_8, %c0_9], %22 {strides = array<i32>} : memref<16x128xf32, #tpu.memory_space<vmem>>, vector<16x128xf32>,
    %c0_10 = arith.constant 0 : index
    %c0_11 = arith.constant 0 : index
    %24 = vector.load %arg7[%c0_10, %c0_11] : memref<16x128xf32, #tpu.memory_space<vmem>>, vector<16x128xf32>
    tpu.vector_store %arg7[%c0_10, %c0_11], %20 {strides = array<i32>} : memref<16x128xf32, #tpu.memory_space<vmem>>, vector<16x128xf32>,
    return
  }
  func.func @transform_0(%arg0: i32, %arg1: i32) -> (i32, i32) {
    %c0_i32 = arith.constant 0 : i32
    %c0_i32_0 = arith.constant 0 : i32
    return %arg0, %c0_i32 : i32, i32
  }
  func.func @transform_1(%arg0: i32, %arg1: i32) -> (i32, i32) {
    %c0_i32 = arith.constant 0 : i32
    return %arg0, %arg1 : i32, i32
  }
  func.func @transform_2(%arg0: i32, %arg1: i32) -> (i32, i32) {
    %c0_i32 = arith.constant 0 : i32
    %c0_i32_0 = arith.constant 0 : i32
    return %c0_i32, %arg1 : i32, i32
  }
  func.func @transform_3(%arg0: i32, %arg1: i32) -> (i32, i32) {
    %c0_i32 = arith.constant 0 : i32
    %c0_i32_0 = arith.constant 0 : i32
    return %c0_i32, %arg1 : i32, i32
  }
  func.func @transform_4(%arg0: i32, %arg1: i32) -> (i32, i32) {
    %c0_i32 = arith.constant 0 : i32
    return %arg0, %arg1 : i32, i32
  }
  func.func @transform_5(%arg0: i32, %arg1: i32) -> (i32, i32) {
    %c0_i32 = arith.constant 0 : i32
    return %arg0, %arg1 : i32, i32
  }
}

</mosaic_0001>

<llo_original>
// kernel: lstm_forward.1
$region0: #{lstm_forward.1}
  #allocation0 [shape = 'u32[]', space=smem, size = 0x4, offset = 0x4, fixed_abs, tag = 'smem constant byte address 0x4 - core index']
  #allocation1 [shape = 'u32[72,128]{1,0:T(1,128)}', space=vmem, size = 0x9000, scoped, tag = 'internal scratch']
  %s0 = inlined_call_operand.vmem [shape: bf16[16,128], index: 0, kind: input, shape index: {}]
  %s1 = inlined_call_operand.vmem [shape: f32[16,128], index: 1, kind: input, shape index: {}]
  %s2 = inlined_call_operand.hbm [shape: bf16[128,512], index: 2, kind: input, shape index: {}]
  %s3 = inlined_call_operand.vmem [shape: f32[1,512], index: 3, kind: input, shape index: {}]
  %s4 = inlined_call_operand.vmem [shape: f32[16,128], index: 4, kind: output, shape index: {0}]
  %s5 = inlined_call_operand.vmem [shape: f32[16,128], index: 5, kind: output, shape index: {1}]
  %6 = xla_tuple %s4, %s5
  %s7 = sld [smem:[#allocation0]]
  $region38: #{lstm_forward.1} parent=0
    _
  %s9 = ssub.s32 1, %s7
  %s10 = scalar_select 0, %s9, %s7
  $region1: #{lstm_forward.1} parent=0
    #allocation2 [shape = 'u8[131072]{0}', space=vmem, size = 0x20000, scoped, tag = 'input window, operand 2, single buffered']
    #allocation3 [shape = 's32[1]{0}', space=sflag, size = 0x4, scoped, tag = 'scoped memory for lstm_forward.1']
    %11 = vsyncpa [#allocation3], 0
    // Predicated region
    $region2: #{lstm_forward.1} parent=1 // pred_check
      _
    $region3: #{lstm_forward.1} parent=1 // pred_check_branch
      %13 = sbr.rel (0) target = $region5
    $region4: #{lstm_forward.1} parent=1 // pred_region
      _
    $region5: #{lstm_forward.1} parent=1 // pred_fallthru
      _
    // Predicated region
    $region6: #{lstm_forward.1} parent=1 // pred_check
      _
    $region7: #{lstm_forward.1} parent=1 // pred_check_branch
      %15 = sbr.rel (0) target = $region9
    $region8: #{lstm_forward.1} parent=1 // pred_region
      _
    $region9: #{lstm_forward.1} parent=1 // pred_fallthru
      _
    // Predicated region
    $region10: #{lstm_forward.1} parent=1 // pred_check
      _
    $region11: #{lstm_forward.1} parent=1 // pred_check_branch
      %17 = sbr.rel (0) target = $region13
    $region12: #{lstm_forward.1} parent=1 // pred_region
      %19 = vsyncadd [#allocation3], 0
      %s20 = sshll.u32 %s2, 4
      %s21 = int_to_ptr.hbm [resolvable:$true] %s20
      %s22 = sshll.u32 [#allocation2], 4
      %s23 = int_to_ptr.vmem [resolvable:$true] %s22
      %28 = dma.hbm_to_vmem [thread:$0]  %s21, 4096, %s23, [#allocation3], 256, 256, 16
    $region13: #{lstm_forward.1} parent=1 // pred_fallthru
      _
    // Predicated region
    $region14: #{lstm_forward.1} parent=1 // pred_check
      _
    $region15: #{lstm_forward.1} parent=1 // pred_check_branch
      %30 = sbr.rel (0) target = $region17
    $region16: #{lstm_forward.1} parent=1 // pred_region
      _
    $region17: #{lstm_forward.1} parent=1 // pred_fallthru
      _
    // Predicated region
    $region18: #{lstm_forward.1} parent=1 // pred_check
      _
    $region19: #{lstm_forward.1} parent=1 // pred_check_branch
      %32 = sbr.rel (0) target = $region21
    $region20: #{lstm_forward.1} parent=1 // pred_region
      %34 = dma.done [#allocation3], 4096
    $region21: #{lstm_forward.1} parent=1 // pred_fallthru
      _
    %v35 = vld [vmem:[%s0] sm:$0xf]
    %v36 = vld [vmem:[%s0 + $0x4] sm:$0xf]
    %v37 = vld [vmem:[#allocation2] sm:$0xff]
    %v38 = vld [vmem:[#allocation2 + $0x8] sm:$0xff]
    %v39 = vld [vmem:[#allocation2 + $0x10] sm:$0xff]
    %v40 = vld [vmem:[#allocation2 + $0x18] sm:$0xff]
    %v41 = vld [vmem:[#allocation2 + $0x20] sm:$0xff]
    %v42 = vld [vmem:[#allocation2 + $0x28] sm:$0xff]
    %v43 = vld [vmem:[#allocation2 + $0x30] sm:$0xff]
    %v44 = vld [vmem:[#allocation2 + $0x38] sm:$0xff]
    %v45 = vld [vmem:[#allocation2 + $0x40] sm:$0xff]
    %v46 = vld [vmem:[#allocation2 + $0x48] sm:$0xff]
    %v47 = vld [vmem:[#allocation2 + $0x50] sm:$0xff]
    %v48 = vld [vmem:[#allocation2 + $0x58] sm:$0xff]
    %v49 = vld [vmem:[#allocation2 + $0x60] sm:$0xff]
    %v50 = vld [vmem:[#allocation2 + $0x68] sm:$0xff]
    %v51 = vld [vmem:[#allocation2 + $0x70] sm:$0xff]
    %v52 = vld [vmem:[#allocation2 + $0x78] sm:$0xff]
    %v53 = vld [vmem:[#allocation2 + $0x80] sm:$0xff]
    %v54 = vld [vmem:[#allocation2 + $0x88] sm:$0xff]
    %v55 = vld [vmem:[#allocation2 + $0x90] sm:$0xff]
    %v56 = vld [vmem:[#allocation2 + $0x98] sm:$0xff]
    %v57 = vld [vmem:[#allocation2 + $0xa0] sm:$0xff]
    %v58 = vld [vmem:[#allocation2 + $0xa8] sm:$0xff]
    %v59 = vld [vmem:[#allocation2 + $0xb0] sm:$0xff]
    %v60 = vld [vmem:[#allocation2 + $0xb8] sm:$0xff]
    %v61 = vld [vmem:[#allocation2 + $0xc0] sm:$0xff]
    %v62 = vld [vmem:[#allocation2 + $0xc8] sm:$0xff]
    %v63 = vld [vmem:[#allocation2 + $0xd0] sm:$0xff]
    %v64 = vld [vmem:[#allocation2 + $0xd8] sm:$0xff]
    %v65 = vld [vmem:[#allocation2 + $0xe0] sm:$0xff]
    %v66 = vld [vmem:[#allocation2 + $0xe8] sm:$0xff]
    %v67 = vld [vmem:[#allocation2 + $0xf0] sm:$0xff]
    %v68 = vld [vmem:[#allocation2 + $0xf8] sm:$0xff]
    %v69 = vld [vmem:[%s3] sm:$0xf]
    %v71 = vperm.slane %v69, 0
    %v72 = vperm.slane %v69, 1
    %v73 = vperm.slane %v69, 2
    %v74 = vperm.slane %v69, 3
    %v81 = vunpack.c.l.b16 %v35
    %v82 = vunpack.c.l.b16 %v36
    %v83 = vpack.c.b16 %v82, %v81
    %v117 = vunpack.c.l.b16 %v37
    %v118 = vunpack.c.h.b16 %v37
    %v119 = vunpack.c.l.b16 %v38
    %v120 = vunpack.c.h.b16 %v38
    %v121 = vunpack.c.l.b16 %v39
    %v122 = vunpack.c.h.b16 %v39
    %v123 = vunpack.c.l.b16 %v40
    %v124 = vunpack.c.h.b16 %v40
    %v125 = vunpack.c.l.b16 %v41
    %v126 = vunpack.c.h.b16 %v41
    %v127 = vunpack.c.l.b16 %v42
    %v128 = vunpack.c.h.b16 %v42
    %v129 = vunpack.c.l.b16 %v43
    %v130 = vunpack.c.h.b16 %v43
    %v131 = vunpack.c.l.b16 %v44
    %v132 = vunpack.c.h.b16 %v44
    %v133 = vunpack.c.l.b16 %v45
    %v134 = vunpack.c.h.b16 %v45
    %v135 = vunpack.c.l.b16 %v46
    %v136 = vunpack.c.h.b16 %v46
    %v137 = vunpack.c.l.b16 %v47
    %v138 = vunpack.c.h.b16 %v47
    %v139 = vunpack.c.l.b16 %v48
    %v140 = vunpack.c.h.b16 %v48
    %v141 = vunpack.c.l.b16 %v49
    %v142 = vunpack.c.h.b16 %v49
    %v143 = vunpack.c.l.b16 %v50
    %v144 = vunpack.c.h.b16 %v50
    %v145 = vunpack.c.l.b16 %v51
    %v146 = vunpack.c.h.b16 %v51
    %v147 = vunpack.c.l.b16 %v52
    %v148 = vunpack.c.h.b16 %v52
    %v149 = vunpack.c.l.b16 %v53
    %v150 = vunpack.c.h.b16 %v53
    %v151 = vunpack.c.l.b16 %v54
    %v152 = vunpack.c.h.b16 %v54
    %v153 = vunpack.c.l.b16 %v55
    %v154 = vunpack.c.h.b16 %v55
    %v155 = vunpack.c.l.b16 %v56
    %v156 = vunpack.c.h.b16 %v56
    %v157 = vunpack.c.l.b16 %v57
    %v158 = vunpack.c.h.b16 %v57
    %v159 = vunpack.c.l.b16 %v58
    %v160 = vunpack.c.h.b16 %v58
    %v161 = vunpack.c.l.b16 %v59
    %v162 = vunpack.c.h.b16 %v59
    %v163 = vunpack.c.l.b16 %v60
    %v164 = vunpack.c.h.b16 %v60
    %v165 = vunpack.c.l.b16 %v61
    %v166 = vunpack.c.h.b16 %v61
    %v167 = vunpack.c.l.b16 %v62
    %v168 = vunpack.c.h.b16 %v62
    %v169 = vunpack.c.l.b16 %v63
    %v170 = vunpack.c.h.b16 %v63
    %v171 = vunpack.c.l.b16 %v64
    %v172 = vunpack.c.h.b16 %v64
    %v173 = vunpack.c.l.b16 %v65
    %v174 = vunpack.c.h.b16 %v65
    %v175 = vunpack.c.l.b16 %v66
    %v176 = vunpack.c.h.b16 %v66
    %v177 = vunpack.c.l.b16 %v67
    %v178 = vunpack.c.h.b16 %v67
    %v179 = vunpack.c.l.b16 %v68
    %v180 = vunpack.c.h.b16 %v68
    %v181 = vpack.c.b16 %v121, %v117
    %v182 = vpack.c.b16 %v122, %v118
    %v183 = vpack.c.b16 %v123, %v119
    %v184 = vpack.c.b16 %v124, %v120
    %v185 = vpack.c.b16 %v129, %v125
    %v186 = vpack.c.b16 %v130, %v126
    %v187 = vpack.c.b16 %v131, %v127
    %v188 = vpack.c.b16 %v132, %v128
    %v189 = vpack.c.b16 %v137, %v133
    %v190 = vpack.c.b16 %v138, %v134
    %v191 = vpack.c.b16 %v139, %v135
    %v192 = vpack.c.b16 %v140, %v136
    %v193 = vpack.c.b16 %v145, %v141
    %v194 = vpack.c.b16 %v146, %v142
    %v195 = vpack.c.b16 %v147, %v143
    %v196 = vpack.c.b16 %v148, %v144
    %v197 = vpack.c.b16 %v153, %v149
    %v198 = vpack.c.b16 %v154, %v150
    %v199 = vpack.c.b16 %v155, %v151
    %v200 = vpack.c.b16 %v156, %v152
    %v201 = vpack.c.b16 %v161, %v157
    %v202 = vpack.c.b16 %v162, %v158
    %v203 = vpack.c.b16 %v163, %v159
    %v204 = vpack.c.b16 %v164, %v160
    %v205 = vpack.c.b16 %v169, %v165
    %v206 = vpack.c.b16 %v170, %v166
    %v207 = vpack.c.b16 %v171, %v167
    %v208 = vpack.c.b16 %v172, %v168
    %v209 = vpack.c.b16 %v177, %v173
    %v210 = vpack.c.b16 %v178, %v174
    %v211 = vpack.c.b16 %v179, %v175
    %v212 = vpack.c.b16 %v180, %v176
    %245 = vmatpush.bf16.msra.mxu0 %v209
    %246 = vmatpush.bf16.msra.mxu0 %v205
    %247 = vmatpush.bf16.msra.mxu0 %v201
    %248 = vmatpush.bf16.msra.mxu0 %v197
    %249 = vmatpush.bf16.msra.mxu0 %v193
    %250 = vmatpush.bf16.msra.mxu0 %v189
    %251 = vmatpush.bf16.msra.mxu0 %v185
    %252 = vmatpush.bf16.msra.mxu0 %v181
    %253 = vmatmul.bf16.gmra.mxu0 %v83
    %v254 = vpop.f32.mrf.mxu0
    %v255 = vadd.f32 %v71, %v254
    %v256 = vpop.f32.mrf.mxu0
    %v257 = vadd.f32 %v71, %v256
    %258 = vdwg.mxu0
    %259 = vmatpush.bf16.msra.mxu0 %v210
    %260 = vmatpush.bf16.msra.mxu0 %v206
    %261 = vmatpush.bf16.msra.mxu0 %v202
    %262 = vmatpush.bf16.msra.mxu0 %v198
    %263 = vmatpush.bf16.msra.mxu0 %v194
    %264 = vmatpush.bf16.msra.mxu0 %v190
    %265 = vmatpush.bf16.msra.mxu0 %v186
    %266 = vmatpush.bf16.msra.mxu0 %v182
    %267 = vmatmul.bf16.gmra.mxu0 %v83
    %v268 = vpop.f32.mrf.mxu0
    %v269 = vadd.f32 %v72, %v268
    %v270 = vpop.f32.mrf.mxu0
    %v271 = vadd.f32 %v72, %v270
    %272 = vdwg.mxu0
    %273 = vmatpush.bf16.msra.mxu0 %v211
    %274 = vmatpush.bf16.msra.mxu0 %v207
    %275 = vmatpush.bf16.msra.mxu0 %v203
    %276 = vmatpush.bf16.msra.mxu0 %v199
    %277 = vmatpush.bf16.msra.mxu0 %v195
    %278 = vmatpush.bf16.msra.mxu0 %v191
    %279 = vmatpush.bf16.msra.mxu0 %v187
    %280 = vmatpush.bf16.msra.mxu0 %v183
    %281 = vmatmul.bf16.gmra.mxu0 %v83
    %v282 = vpop.f32.mrf.mxu0
    %v283 = vadd.f32 %v73, %v282
    %v284 = vpop.f32.mrf.mxu0
    %v285 = vadd.f32 %v73, %v284
    %286 = vdwg.mxu0
    %287 = vmatpush.bf16.msra.mxu0 %v212
    %288 = vmatpush.bf16.msra.mxu0 %v208
    %289 = vmatpush.bf16.msra.mxu0 %v204
    %290 = vmatpush.bf16.msra.mxu0 %v200
    %291 = vmatpush.bf16.msra.mxu0 %v196
    %292 = vmatpush.bf16.msra.mxu0 %v192
    %293 = vmatpush.bf16.msra.mxu0 %v188
    %294 = vmatpush.bf16.msra.mxu0 %v184
    %295 = vmatmul.bf16.gmra.mxu0 %v83
    %v296 = vpop.f32.mrf.mxu0
    %v297 = vadd.f32 %v74, %v296
    %v298 = vpop.f32.mrf.mxu0
    %v299 = vadd.f32 %v74, %v298
    %300 = vdwg.mxu0
    %v301 = vxor.u32 %v255, 2147483648
    %v302 = vxor.u32 %v269, 2147483648
    %v303 = vxor.u32 %v283, 2147483648
    %v304 = vxor.u32 %v257, 2147483648
    %v305 = vxor.u32 %v271, 2147483648
    %v306 = vxor.u32 %v285, 2147483648
    %v307 = vmul.f32 %v301, 1.442695
    %v308 = vpow.pop %v307
    %v309 = vmul.f32 %v302, 1.442695
    %v310 = vpow.pop %v309
    %v311 = vmul.f32 %v303, 1.442695
    %v312 = vpow.pop %v311
    %v313 = vmul.f32 %v304, 1.442695
    %v314 = vpow.pop %v313
    %v315 = vmul.f32 %v305, 1.442695
    %v316 = vpow.pop %v315
    %v317 = vmul.f32 %v306, 1.442695
    %v318 = vpow.pop %v317
    %v319 = vadd.f32 %v308, 1.0
    %v320 = vadd.f32 %v310, 1.0
    %v321 = vadd.f32 %v312, 1.0
    %v322 = vadd.f32 %v314, 1.0
    %v323 = vadd.f32 %v316, 1.0
    %v324 = vadd.f32 %v318, 1.0
    %v325 = vrcp.pop %v319
    %v326 = vmul.f32 %v319, %v325
    %v327 = vsub.f32 1.0, %v326
    %v328 = vmul.f32 %v325, %v327
    %v329 = vadd.f32 %v325, %v328
    %vm330 = vweird.f32 %v319
    %vm331 = vweird.f32 %v325
    %vm332 = vmor %vm330, %vm331
    %v333 = vsel %vm332, %v325, %v329
    %v334 = vand.u32 2147483647, %v319
    %vm335 = vcmp.eq.f32.partialorder %v334, 8.507059e+37
    %v336 = vand.u32 %v319, 2147483648
    %v337 = vor.u32 1.1754944e-38, %v336
    %v338 = vsel %vm335, %v337, %v333
    %v339 = vmul.f32 1.0, %v338
    %v340 = vrcp.pop %v320
    %v341 = vmul.f32 %v320, %v340
    %v342 = vsub.f32 1.0, %v341
    %v343 = vmul.f32 %v340, %v342
    %v344 = vadd.f32 %v340, %v343
    %vm345 = vweird.f32 %v320
    %vm346 = vweird.f32 %v340
    %vm347 = vmor %vm345, %vm346
    %v348 = vsel %vm347, %v340, %v344
    %v349 = vand.u32 2147483647, %v320
    %vm350 = vcmp.eq.f32.partialorder %v349, 8.507059e+37
    %v351 = vand.u32 %v320, 2147483648
    %v352 = vor.u32 1.1754944e-38, %v351
    %v353 = vsel %vm350, %v352, %v348
    %v354 = vmul.f32 1.0, %v353
    %v355 = vrcp.pop %v321
    %v356 = vmul.f32 %v321, %v355
    %v357 = vsub.f32 1.0, %v356
    %v358 = vmul.f32 %v355, %v357
    %v359 = vadd.f32 %v355, %v358
    %vm360 = vweird.f32 %v321
    %vm361 = vweird.f32 %v355
    %vm362 = vmor %vm360, %vm361
    %v363 = vsel %vm362, %v355, %v359
    %v364 = vand.u32 2147483647, %v321
    %vm365 = vcmp.eq.f32.partialorder %v364, 8.507059e+37
    %v366 = vand.u32 %v321, 2147483648
    %v367 = vor.u32 1.1754944e-38, %v366
    %v368 = vsel %vm365, %v367, %v363
    %v369 = vmul.f32 1.0, %v368
    %v370 = vrcp.pop %v322
    %v371 = vmul.f32 %v322, %v370
    %v372 = vsub.f32 1.0, %v371
    %v373 = vmul.f32 %v370, %v372
    %v374 = vadd.f32 %v370, %v373
    %vm375 = vweird.f32 %v322
    %vm376 = vweird.f32 %v370
    %vm377 = vmor %vm375, %vm376
    %v378 = vsel %vm377, %v370, %v374
    %v379 = vand.u32 2147483647, %v322
    %vm380 = vcmp.eq.f32.partialorder %v379, 8.507059e+37
    %v381 = vand.u32 %v322, 2147483648
    %v382 = vor.u32 1.1754944e-38, %v381
    %v383 = vsel %vm380, %v382, %v378
    %v384 = vmul.f32 1.0, %v383
    %v385 = vrcp.pop %v323
    %v386 = vmul.f32 %v323, %v385
    %v387 = vsub.f32 1.0, %v386
    %v388 = vmul.f32 %v385, %v387
    %v389 = vadd.f32 %v385, %v388
    %vm390 = vweird.f32 %v323
    %vm391 = vweird.f32 %v385
    %vm392 = vmor %vm390, %vm391
    %v393 = vsel %vm392, %v385, %v389
    %v394 = vand.u32 2147483647, %v323
    %vm395 = vcmp.eq.f32.partialorder %v394, 8.507059e+37
    %v396 = vand.u32 %v323, 2147483648
    %v397 = vor.u32 1.1754944e-38, %v396
    %v398 = vsel %vm395, %v397, %v393
    %v399 = vmul.f32 1.0, %v398
    %v400 = vrcp.pop %v324
    %v401 = vmul.f32 %v324, %v400
    %v402 = vsub.f32 1.0, %v401
    %v403 = vmul.f32 %v400, %v402
    %v404 = vadd.f32 %v400, %v403
    %vm405 = vweird.f32 %v324
    %vm406 = vweird.f32 %v400
    %vm407 = vmor %vm405, %vm406
    %v408 = vsel %vm407, %v400, %v404
    %v409 = vand.u32 2147483647, %v324
    %vm410 = vcmp.eq.f32.partialorder %v409, 8.507059e+37
    %v411 = vand.u32 %v324, 2147483648
    %v412 = vor.u32 1.1754944e-38, %v411
    %v413 = vsel %vm410, %v412, %v408
    %v414 = vmul.f32 1.0, %v413
    %v415 = vtanh.pop %v297
    %v416 = vtanh.pop %v299
    %v417 = vld [vmem:[%s1] sm:$0xff]
    %v418 = vld [vmem:[%s1 + $0x8] sm:$0xff]
    %v419 = vmul.f32 %v417, %v354
    %v420 = vmul.f32 %v418, %v399
    %v421 = vmul.f32 %v339, %v415
    %v422 = vmul.f32 %v384, %v416
    %v423 = vadd.f32 %v419, %v421
    %v424 = vadd.f32 %v420, %v422
    %v425 = vtanh.pop %v423
    %v426 = vtanh.pop %v424
    %v427 = vmul.f32 %v369, %v425
    %v428 = vmul.f32 %v414, %v426
    %429 = vst [vmem:[%s4] sm:$0xff] %v427
    %430 = vst [vmem:[%s4 + $0x8] sm:$0xff] %v428
    %431 = vst [vmem:[%s5] sm:$0xff] %v423
    %432 = vst [vmem:[%s5 + $0x8] sm:$0xff] %v424
    // Predicated region
    $region22: #{lstm_forward.1} parent=1 // pred_check
      _
    $region23: #{lstm_forward.1} parent=1 // pred_check_branch
      %434 = sbr.rel (0) target = $region25
    $region24: #{lstm_forward.1} parent=1 // pred_region
      _
    $region25: #{lstm_forward.1} parent=1 // pred_fallthru
      _
    // Predicated region
    $region26: #{lstm_forward.1} parent=1 // pred_check
      _
    $region27: #{lstm_forward.1} parent=1 // pred_check_branch
      %436 = sbr.rel (0) target = $region29
    $region28: #{lstm_forward.1} parent=1 // pred_region
      _
    $region29: #{lstm_forward.1} parent=1 // pred_fallthru
      _
    // Predicated region
    $region30: #{lstm_forward.1} parent=1 // pred_check
      _
    $region31: #{lstm_forward.1} parent=1 // pred_check_branch
      %438 = sbr.rel (0) target = $region33
    $region32: #{lstm_forward.1} parent=1 // pred_region
      _
    $region33: #{lstm_forward.1} parent=1 // pred_fallthru
      _
    // Predicated region
    $region34: #{lstm_forward.1} parent=1 // pred_check
      _
    $region35: #{lstm_forward.1} parent=1 // pred_check_branch
      %440 = sbr.rel (0) target = $region37
    $region36: #{lstm_forward.1} parent=1 // pred_region
      _
    $region37: #{lstm_forward.1} parent=1 // pred_fallthru
      _
    %441 = vsyncpa [#allocation3], 1

</llo_original>
